<compile_context>
chip_gen: v5e
topology: v5e:2x2
jax: 0.10.0
libtpu: 0.0.40
codegen_flags: <defaults>
</compile_context>

<pallas_src>
import functools

import jax
import jax.numpy as jnp
from jax.experimental import pallas as pl
from jax.experimental.pallas import tpu as pltpu


def _mix32(h):
    """murmur3 fmix32: turn a uint32 counter into well-mixed uniform bits."""
    h = h ^ (h >> 16)
    h = h * jnp.uint32(0x85EBCA6B)
    h = h ^ (h >> 13)
    h = h * jnp.uint32(0xC2B2AE35)
    h = h ^ (h >> 16)
    return h


def linear_layer_kernel(seed_ref, x_ref, w_ref, b_ref, gamma_ref, beta_ref,
                        o_ref, *, p, eps, tile_n, n_cols, n_batch):
    j = pl.program_id(0)

    # ---- Linear: y = x @ W^T + b ------------------------------------------
    # Weight tile is torch-layout (tile_n, IN); contract IN of both operands
    # so the MXU consumes the transposed operand directly (no HBM transpose).
    x = x_ref[...].astype(jnp.bfloat16)                    # (B, IN)
    w = w_ref[...]                                         # (tile_n, IN) bf16
    y = jax.lax.dot_general(
        x, w,
        dimension_numbers=(((1,), (1,)), ((), ())),
        preferred_element_type=jnp.float32)                # (B, tile_n) f32
    y = y + b_ref[...]

    # ---- BatchNorm1d (training: batch stats, biased variance), f32 --------
    inv_n = 1.0 / n_batch
    mean = jnp.sum(y, axis=0, keepdims=True) * inv_n       # (1, tile_n)
    ex2 = jnp.sum(y * y, axis=0, keepdims=True) * inv_n
    var = jnp.maximum(ex2 - mean * mean, 0.0)              # biased variance
    y = (y - mean) * jax.lax.rsqrt(var + eps)
    y = y * gamma_ref[...] + beta_ref[...]

    # ---- ReLU ---------------------------------------------------------------
    y = jnp.maximum(y, 0.0)

    # ---- Dropout (inverted, keep-prob = 1-p) --------------------------------
    # Counter-based hash over global (row, col) indices + seed: each OUT tile
    # draws an independent stream; the mask is a single uint32 compare.
    if p > 0.0:
        rows = jax.lax.broadcasted_iota(jnp.int32, y.shape, 0).astype(jnp.uint32)
        cols = jax.lax.broadcasted_iota(jnp.int32, y.shape, 1).astype(jnp.uint32)
        cols = cols + (j * tile_n).astype(jnp.uint32)
        cnt = rows * jnp.uint32(n_cols) + cols
        skey = _mix32(seed_ref[0].astype(jnp.uint32) + jnp.uint32(0x9E3779B9))
        bits = _mix32(cnt ^ skey)
        threshold = jnp.uint32(min(int(round(p * 2.0 ** 32)), 2 ** 32 - 1))
        keep = bits >= threshold
        y = jnp.where(keep, y * (1.0 / (1.0 - p)), 0.0)

    o_ref[...] = y.astype(o_ref.dtype)


def linear_layer_forward(x, weight, bias, gamma, beta, seed,
                         *, dropout_prob=0.2, eps=1e-5, tile_n=128):
    """x: (B, IN) f32; weight: (OUT, IN) torch layout; bias/gamma/beta: (OUT,)."""
    x = jnp.asarray(x, jnp.float32)
    B, IN = x.shape
    OUT = weight.shape[0]

    # Lane-dense OUT: pad to a multiple of tile_n.  Padded features are inert
    # (zero weight/bias, gamma=1, beta=0) and sliced off at the end.
    n_tiles = pl.cdiv(OUT, tile_n)
    OUT_P = n_tiles * tile_n
    pad = OUT_P - OUT

    w = jnp.asarray(weight, jnp.bfloat16)                  # bf16 storage, (OUT, IN)
    b2 = jnp.asarray(bias, jnp.float32).reshape(1, OUT)
    g2 = jnp.asarray(gamma, jnp.float32).reshape(1, OUT)
    be2 = jnp.asarray(beta, jnp.float32).reshape(1, OUT)
    if pad:
        w = jnp.pad(w, ((0, pad), (0, 0)))
        b2 = jnp.pad(b2, ((0, 0), (0, pad)))
        g2 = jnp.pad(g2, ((0, 0), (0, pad)), constant_values=1.0)
        be2 = jnp.pad(be2, ((0, 0), (0, pad)))
    seed_arr = jnp.asarray([seed], jnp.int32)

    kernel = functools.partial(
        linear_layer_kernel, p=float(dropout_prob), eps=float(eps),
        tile_n=tile_n, n_cols=OUT_P, n_batch=B)

    # VMEM budget: 2x bf16 weight tile + resident x + 2x f32 out tile + params.
    vmem_need = (2 * tile_n * IN * 2 + 2 * B * IN * 4
                 + 2 * B * tile_n * 4 + 6 * tile_n * 4)
    vmem_limit = int(min(max(2 * vmem_need, 4 << 20), 48 << 20))

    cost = pl.CostEstimate(
        flops=2 * B * IN * OUT_P,
        transcendentals=0,
        bytes_accessed=B * IN * 4 + OUT_P * IN * 2 + B * OUT_P * 4 + 3 * OUT_P * 4,
    )

    out = pl.pallas_call(
        kernel,
        out_shape=jax.ShapeDtypeStruct((B, OUT_P), jnp.float32),
        grid_spec=pltpu.PrefetchScalarGridSpec(
            num_scalar_prefetch=1,                                  # seed -> SMEM
            grid=(n_tiles,),
            in_specs=[
                pl.BlockSpec((B, IN), lambda j, seed: (0, 0)),       # x, resident
                pl.BlockSpec((tile_n, IN), lambda j, seed: (j, 0)),  # weight tile
                pl.BlockSpec((1, tile_n), lambda j, seed: (0, j)),   # bias tile
                pl.BlockSpec((1, tile_n), lambda j, seed: (0, j)),   # gamma tile
                pl.BlockSpec((1, tile_n), lambda j, seed: (0, j)),   # beta tile
            ],
            out_specs=pl.BlockSpec((B, tile_n), lambda j, seed: (0, j)),
        ),
        compiler_params=pltpu.CompilerParams(
            dimension_semantics=("parallel",),
            vmem_limit_bytes=vmem_limit,
        ),
        cost_estimate=cost,
    )(seed_arr, x, w, b2, g2, be2)

    return out[:, :OUT] if pad else out


if __name__ == "__main__":
    # Small shapes consistent with the module's forward: (batch, in_features)
    batch, in_features, out_features = 8, 32, 64

    key = jax.random.PRNGKey(0)
    kx, kw, kb = jax.random.split(key, 3)

    x = jax.random.normal(kx, (batch, in_features), dtype=jnp.float32)

    # Deterministic parameter init (torch-Linear-style uniform bounds).
    bound = 1.0 / (in_features ** 0.5)
    weight = jax.random.uniform(kw, (out_features, in_features),
                                minval=-bound, maxval=bound, dtype=jnp.float32)
    bias = jax.random.uniform(kb, (out_features,),
                              minval=-bound, maxval=bound, dtype=jnp.float32)
    gamma = jnp.ones((out_features,), jnp.float32)   # BatchNorm1d weight init
    beta = jnp.zeros((out_features,), jnp.float32)   # BatchNorm1d bias init

    out = linear_layer_forward(x, weight, bias, gamma, beta, seed=0,
                               dropout_prob=0.2)
    jax.block_until_ready(out)

    assert out.shape == (batch, out_features)
    assert bool(jnp.isfinite(out).all())
    print("KERNEL_OK")
</pallas_src>

<mosaic_0001>
module attributes {stable_mosaic.version = 11 : i64} {
  func.func @linear_layer_kernel(%arg0: i32, %arg1: memref<1xi32, #tpu.memory_space<smem>>, %arg2: memref<8x32xf32, #tpu.memory_space<vmem>>, %arg3: memref<128x32xbf16, #tpu.memory_space<vmem>>, %arg4: memref<1x128xf32, #tpu.memory_space<vmem>>, %arg5: memref<1x128xf32, #tpu.memory_space<vmem>>, %arg6: memref<1x128xf32, #tpu.memory_space<vmem>>, %arg7: memref<8x128xf32, #tpu.memory_space<vmem>>) attributes {dimension_semantics = [#tpu.dimension_semantics<parallel>], iteration_bounds = array<i64: 1>, scalar_prefetch = 1 : i64, scratch_operands = 0 : i64, tpu.core_type = #tpu.core_type<tc>, window_params = [{pipeline_mode = #tpu.pipeline_mode<synchronous>, transform_indices = @transform_0, window_bounds = array<i64: 8, 32>}, {transform_indices = @transform_1, window_bounds = array<i64: 128, 32>}, {transform_indices = @transform_2, window_bounds = array<i64: 1, 128>}, {transform_indices = @transform_3, window_bounds = array<i64: 1, 128>}, {transform_indices = @transform_4, window_bounds = array<i64: 1, 128>}, {transform_indices = @transform_5, window_bounds = array<i64: 8, 128>}]} {
    %c0 = arith.constant 0 : index
    %c0_0 = arith.constant 0 : index
    %0 = vector.load %arg2[%c0, %c0_0] : memref<8x32xf32, #tpu.memory_space<vmem>>, vector<8x32xf32>
    %1 = arith.truncf %0 : vector<8x32xf32> to vector<8x32xbf16>
    %c0_1 = arith.constant 0 : index
    %c0_2 = arith.constant 0 : index
    %2 = vector.load %arg3[%c0_1, %c0_2] : memref<128x32xbf16, #tpu.memory_space<vmem>>, vector<128x32xbf16>
    %cst = arith.constant dense<0.000000e+00> : vector<8x128xf32>
    %3 = tpu.matmul %1, %2, %cst {dimension_numbers = #tpu.dot_dimension_numbers<[1], [1], [0], [0], [0, 0, 1, 0], [], []>} : vector<8x32xbf16>, vector<128x32xbf16>, vector<8x128xf32> -> vector<8x128xf32>
    %c0_3 = arith.constant 0 : index
    %c0_4 = arith.constant 0 : index
    %4 = vector.load %arg4[%c0_3, %c0_4] : memref<1x128xf32, #tpu.memory_space<vmem>>, vector<1x128xf32>
    %5 = vector.broadcast %4 : vector<1x128xf32> to vector<8x128xf32>
    %6 = arith.addf %3, %5 : vector<8x128xf32>
    %cst_5 = arith.constant dense<0.000000e+00> : vector<128xf32>
    %7 = vector.multi_reduction <add>, %6, %cst_5 [0] : vector<8x128xf32> to vector<128xf32>
    %8 = vector.shape_cast %7 : vector<128xf32> to vector<1x128xf32>
    %cst_6 = arith.constant 1.250000e-01 : f32
    %9 = vector.broadcast %cst_6 : f32 to vector<1x128xf32>
    %10 = arith.mulf %8, %9 : vector<1x128xf32>
    %11 = arith.mulf %6, %6 : vector<8x128xf32>
    %cst_7 = arith.constant dense<0.000000e+00> : vector<128xf32>
    %12 = vector.multi_reduction <add>, %11, %cst_7 [0] : vector<8x128xf32> to vector<128xf32>
    %13 = vector.shape_cast %12 : vector<128xf32> to vector<1x128xf32>
    %cst_8 = arith.constant 1.250000e-01 : f32
    %14 = vector.broadcast %cst_8 : f32 to vector<1x128xf32>
    %15 = arith.mulf %13, %14 : vector<1x128xf32>
    %16 = arith.mulf %10, %10 : vector<1x128xf32>
    %17 = arith.subf %15, %16 : vector<1x128xf32>
    %cst_9 = arith.constant 0.000000e+00 : f32
    %18 = vector.broadcast %cst_9 : f32 to vector<1x128xf32>
    %19 = arith.maximumf %17, %18 : vector<1x128xf32>
    %20 = vector.broadcast %10 : vector<1x128xf32> to vector<8x128xf32>
    %21 = arith.subf %6, %20 : vector<8x128xf32>
    %cst_10 = arith.constant 9.99999974E-6 : f32
    %22 = vector.broadcast %cst_10 : f32 to vector<1x128xf32>
    %23 = arith.addf %19, %22 : vector<1x128xf32>
    %24 = math.rsqrt %23 : vector<1x128xf32>
    %25 = vector.broadcast %24 : vector<1x128xf32> to vector<8x128xf32>
    %26 = arith.mulf %21, %25 : vector<8x128xf32>
    %c0_11 = arith.constant 0 : index
    %c0_12 = arith.constant 0 : index
    %27 = vector.load %arg5[%c0_11, %c0_12] : memref<1x128xf32, #tpu.memory_space<vmem>>, vector<1x128xf32>
    %28 = vector.broadcast %27 : vector<1x128xf32> to vector<8x128xf32>
    %29 = arith.mulf %26, %28 : vector<8x128xf32>
    %c0_13 = arith.constant 0 : index
    %c0_14 = arith.constant 0 : index
    %30 = vector.load %arg6[%c0_13, %c0_14] : memref<1x128xf32, #tpu.memory_space<vmem>>, vector<1x128xf32>
    %31 = vector.broadcast %30 : vector<1x128xf32> to vector<8x128xf32>
    %32 = arith.addf %29, %31 : vector<8x128xf32>
    %cst_15 = arith.constant 0.000000e+00 : f32
    %33 = vector.broadcast %cst_15 : f32 to vector<8x128xf32>
    %34 = arith.maximumf %32, %33 : vector<8x128xf32>
    %35 = tpu.iota {dimensions = array<i32: 0>} : vector<8x128xi32>
    %36 = tpu.iota {dimensions = array<i32: 1>} : vector<8x128xi32>
    %c128_i32 = arith.constant 128 : i32
    %37 = arith.muli %arg0, %c128_i32 : i32
    %38 = vector.broadcast %37 : i32 to vector<8x128xi32>
    %39 = arith.addi %36, %38 : vector<8x128xi32>
    %c128_i32_16 = arith.constant 128 : i32
    %40 = vector.broadcast %c128_i32_16 : i32 to vector<8x128xi32>
    %41 = arith.muli %35, %40 : vector<8x128xi32>
    %42 = arith.addi %41, %39 : vector<8x128xi32>
    %c0_17 = arith.constant 0 : index
    %43 = memref.load %arg1[%c0_17] : memref<1xi32, #tpu.memory_space<smem>>
    %c-1640531527_i32 = arith.constant -1640531527 : i32
    %44 = arith.addi %43, %c-1640531527_i32 : i32
    %c16_i32 = arith.constant 16 : i32
    %45 = arith.shrui %44, %c16_i32 : i32
    %46 = arith.xori %44, %45 : i32
    %c-2048144789_i32 = arith.constant -2048144789 : i32
    %47 = arith.muli %46, %c-2048144789_i32 : i32
    %c13_i32 = arith.constant 13 : i32
    %48 = arith.shrui %47, %c13_i32 : i32
    %49 = arith.xori %47, %48 : i32
    %c-1028477387_i32 = arith.constant -1028477387 : i32
    %50 = arith.muli %49, %c-1028477387_i32 : i32
    %c16_i32_18 = arith.constant 16 : i32
    %51 = arith.shrui %50, %c16_i32_18 : i32
    %52 = arith.xori %50, %51 : i32
    %53 = vector.broadcast %52 : i32 to vector<8x128xi32>
    %54 = arith.xori %42, %53 : vector<8x128xi32>
    %c16_i32_19 = arith.constant 16 : i32
    %55 = vector.broadcast %c16_i32_19 : i32 to vector<8x128xi32>
    %56 = arith.shrui %54, %55 : vector<8x128xi32>
    %57 = arith.xori %54, %56 : vector<8x128xi32>
    %c-2048144789_i32_20 = arith.constant -2048144789 : i32
    %58 = vector.broadcast %c-2048144789_i32_20 : i32 to vector<8x128xi32>
    %59 = arith.muli %57, %58 : vector<8x128xi32>
    %c13_i32_21 = arith.constant 13 : i32
    %60 = vector.broadcast %c13_i32_21 : i32 to vector<8x128xi32>
    %61 = arith.shrui %59, %60 : vector<8x128xi32>
    %62 = arith.xori %59, %61 : vector<8x128xi32>
    %c-1028477387_i32_22 = arith.constant -1028477387 : i32
    %63 = vector.broadcast %c-1028477387_i32_22 : i32 to vector<8x128xi32>
    %64 = arith.muli %62, %63 : vector<8x128xi32>
    %c16_i32_23 = arith.constant 16 : i32
    %65 = vector.broadcast %c16_i32_23 : i32 to vector<8x128xi32>
    %66 = arith.shrui %64, %65 : vector<8x128xi32>
    %67 = arith.xori %64, %66 : vector<8x128xi32>
    %c858993459_i32 = arith.constant 858993459 : i32
    %68 = vector.broadcast %c858993459_i32 : i32 to vector<8x128xi32>
    %69 = arith.cmpi uge, %67, %68 : vector<8x128xi32>
    %cst_24 = arith.constant 1.250000e+00 : f32
    %70 = vector.broadcast %cst_24 : f32 to vector<8x128xf32>
    %71 = arith.mulf %34, %70 : vector<8x128xf32>
    %cst_25 = arith.constant 0.000000e+00 : f32
    %72 = vector.broadcast %cst_25 : f32 to vector<8x128xf32>
    %73 = arith.select %69, %71, %72 : vector<8x128xi1>, vector<8x128xf32>
    %c0_26 = arith.constant 0 : index
    %c0_27 = arith.constant 0 : index
    %74 = vector.load %arg7[%c0_26, %c0_27] : memref<8x128xf32, #tpu.memory_space<vmem>>, vector<8x128xf32>
    tpu.vector_store %arg7[%c0_26, %c0_27], %73 {strides = array<i32>} : memref<8x128xf32, #tpu.memory_space<vmem>>, vector<8x128xf32>,
    return
  }
  func.func @transform_0(%arg0: i32, %arg1: memref<1xi32, #tpu.memory_space<smem>>) -> (i32, i32) {
    %c0_i32 = arith.constant 0 : i32
    %c0_i32_0 = arith.constant 0 : i32
    %c0_i32_1 = arith.constant 0 : i32
    return %c0_i32, %c0_i32_0 : i32, i32
  }
  func.func @transform_1(%arg0: i32, %arg1: memref<1xi32, #tpu.memory_space<smem>>) -> (i32, i32) {
    %c0_i32 = arith.constant 0 : i32
    %c0_i32_0 = arith.constant 0 : i32
    return %arg0, %c0_i32 : i32, i32
  }
  func.func @transform_2(%arg0: i32, %arg1: memref<1xi32, #tpu.memory_space<smem>>) -> (i32, i32) {
    %c0_i32 = arith.constant 0 : i32
    %c0_i32_0 = arith.constant 0 : i32
    return %c0_i32, %arg0 : i32, i32
  }
  func.func @transform_3(%arg0: i32, %arg1: memref<1xi32, #tpu.memory_space<smem>>) -> (i32, i32) {
    %c0_i32 = arith.constant 0 : i32
    %c0_i32_0 = arith.constant 0 : i32
    return %c0_i32, %arg0 : i32, i32
  }
  func.func @transform_4(%arg0: i32, %arg1: memref<1xi32, #tpu.memory_space<smem>>) -> (i32, i32) {
    %c0_i32 = arith.constant 0 : i32
    %c0_i32_0 = arith.constant 0 : i32
    return %c0_i32, %arg0 : i32, i32
  }
  func.func @transform_5(%arg0: i32, %arg1: memref<1xi32, #tpu.memory_space<smem>>) -> (i32, i32) {
    %c0_i32 = arith.constant 0 : i32
    %c0_i32_0 = arith.constant 0 : i32
    return %c0_i32, %arg0 : i32, i32
  }
}

</mosaic_0001>

<llo_original>
// kernel: tpu_custom_call.1
$region0: #{tpu_custom_call.1}
  #allocation0 [shape = 'u32[]', space=smem, size = 0x4, offset = 0x4, fixed_abs, tag = 'smem constant byte address 0x4 - core index']
  #allocation1 [shape = 'u32[72,128]{1,0:T(1,128)}', space=vmem, size = 0x9000, scoped, tag = 'internal scratch']
  #allocation2 [shape = 's32[1]{0}', space=sflag, size = 0x4, scoped, tag = 'scoped memory for tpu_custom_call.1']
  #allocation3 [shape = 's32[1]{0:T(128)S(6)}', space=smem, size = 0x200, scoped, tag = 'prefetched SMEM operand 0']
  %s0 = inlined_call_operand.<no memory space> [shape: s32[1], index: 0, kind: input, shape index: {}]
  %s1 = inlined_call_operand.vmem [shape: f32[8,32], index: 1, kind: input, shape index: {}]
  %s2 = inlined_call_operand.vmem [shape: bf16[128,32], index: 2, kind: input, shape index: {}]
  %s3 = inlined_call_operand.vmem [shape: f32[1,128], index: 3, kind: input, shape index: {}]
  %s4 = inlined_call_operand.vmem [shape: f32[1,128], index: 4, kind: input, shape index: {}]
  %s5 = inlined_call_operand.vmem [shape: f32[1,128], index: 5, kind: input, shape index: {}]
  %s6 = inlined_call_operand.hbm [shape: f32[8,128], index: 6, kind: output, shape index: {}]
  %s7 = sld [smem:[#allocation0]]
  $region30: #{tpu_custom_call.1} parent=0
    _
  %s9 = ssub.s32 1, %s7
  %s10 = scalar_select 0, %s9, %s7
  %11 = sst [smem:[#allocation3]] %s0
  $region1: #{tpu_custom_call.1} parent=0
    #allocation4 [shape = 'u8[4096]{0}', space=vmem, size = 0x1000, scoped, tag = 'output window, operand 0, single buffered']
    #allocation5 [shape = 's32[1]{0}', space=sflag, size = 0x4, scoped, tag = 'scoped memory for tpu_custom_call.1']
    %12 = vsyncpa [#allocation5], 0
    // Predicated region
    $region2: #{tpu_custom_call.1} parent=1 // pred_check
      _
    $region3: #{tpu_custom_call.1} parent=1 // pred_check_branch
      %14 = sbr.rel (0) target = $region5
    $region4: #{tpu_custom_call.1} parent=1 // pred_region
      _
    $region5: #{tpu_custom_call.1} parent=1 // pred_fallthru
      _
    // Predicated region
    $region6: #{tpu_custom_call.1} parent=1 // pred_check
      _
    $region7: #{tpu_custom_call.1} parent=1 // pred_check_branch
      %16 = sbr.rel (0) target = $region9
    $region8: #{tpu_custom_call.1} parent=1 // pred_region
      _
    $region9: #{tpu_custom_call.1} parent=1 // pred_fallthru
      _
    // Predicated region
    $region10: #{tpu_custom_call.1} parent=1 // pred_check
      _
    $region11: #{tpu_custom_call.1} parent=1 // pred_check_branch
      %18 = sbr.rel (0) target = $region13
    $region12: #{tpu_custom_call.1} parent=1 // pred_region
      _
    $region13: #{tpu_custom_call.1} parent=1 // pred_fallthru
      _
    // Predicated region
    $region14: #{tpu_custom_call.1} parent=1 // pred_check
      _
    $region15: #{tpu_custom_call.1} parent=1 // pred_check_branch
      %20 = sbr.rel (0) target = $region17
    $region16: #{tpu_custom_call.1} parent=1 // pred_region
      _
    $region17: #{tpu_custom_call.1} parent=1 // pred_fallthru
      _
    // Predicated region
    $region18: #{tpu_custom_call.1} parent=1 // pred_check
      _
    $region19: #{tpu_custom_call.1} parent=1 // pred_check_branch
      %22 = sbr.rel (0) target = $region21
    $region20: #{tpu_custom_call.1} parent=1 // pred_region
      _
    $region21: #{tpu_custom_call.1} parent=1 // pred_fallthru
      _
    %v23 = vld [vmem:[%s1] sm:$0xff]
    %v24 = vpack.c.bf16 %v23, %v23
    %v25 = vld [vmem:[%s2] sm:$0xf]
    %v26 = vld [vmem:[%s2 + $0x4] sm:$0xf]
    %v27 = vld [vmem:[%s2 + $0x8] sm:$0xf]
    %v28 = vld [vmem:[%s2 + $0xc] sm:$0xf]
    %v29 = vld [vmem:[%s2 + $0x10] sm:$0xf]
    %v30 = vld [vmem:[%s2 + $0x14] sm:$0xf]
    %v31 = vld [vmem:[%s2 + $0x18] sm:$0xf]
    %v32 = vld [vmem:[%s2 + $0x1c] sm:$0xf]
    %v33 = vld [vmem:[%s2 + $0x20] sm:$0xf]
    %v34 = vld [vmem:[%s2 + $0x24] sm:$0xf]
    %v35 = vld [vmem:[%s2 + $0x28] sm:$0xf]
    %v36 = vld [vmem:[%s2 + $0x2c] sm:$0xf]
    %v37 = vld [vmem:[%s2 + $0x30] sm:$0xf]
    %v38 = vld [vmem:[%s2 + $0x34] sm:$0xf]
    %v39 = vld [vmem:[%s2 + $0x38] sm:$0xf]
    %v40 = vld [vmem:[%s2 + $0x3c] sm:$0xf]
    %v41 = vld [vmem:[%s3] sm:$0x1]
    %v43 = vperm.slane %v41, 0
    %v61 = vunpack.c.l.b16 %v25
    %v62 = vunpack.c.l.b16 %v26
    %v63 = vunpack.c.l.b16 %v27
    %v64 = vunpack.c.l.b16 %v28
    %v65 = vunpack.c.l.b16 %v29
    %v66 = vunpack.c.l.b16 %v30
    %v67 = vunpack.c.l.b16 %v31
    %v68 = vunpack.c.l.b16 %v32
    %v69 = vunpack.c.l.b16 %v33
    %v70 = vunpack.c.l.b16 %v34
    %v71 = vunpack.c.l.b16 %v35
    %v72 = vunpack.c.l.b16 %v36
    %v73 = vunpack.c.l.b16 %v37
    %v74 = vunpack.c.l.b16 %v38
    %v75 = vunpack.c.l.b16 %v39
    %v76 = vunpack.c.l.b16 %v40
    %v77 = vpack.c.b16 %v62, %v61
    %v78 = vpack.c.b16 %v64, %v63
    %v79 = vpack.c.b16 %v66, %v65
    %v80 = vpack.c.b16 %v68, %v67
    %v81 = vpack.c.b16 %v70, %v69
    %v82 = vpack.c.b16 %v72, %v71
    %v83 = vpack.c.b16 %v74, %v73
    %v84 = vpack.c.b16 %v76, %v75
    %vm85 = vcmask 261120
    %v87 = vsel %vm85, %v24, 0
    %v90 = vsel %vm85, %v77, 0
    %v93 = vsel %vm85, %v78, 0
    %v96 = vsel %vm85, %v79, 0
    %v99 = vsel %vm85, %v80, 0
    %v102 = vsel %vm85, %v81, 0
    %v105 = vsel %vm85, %v82, 0
    %v108 = vsel %vm85, %v83, 0
    %v111 = vsel %vm85, %v84, 0
    %113 = vmatpush.bf16.xpose.msra.mxu0 %v111
    %114 = vmatpush.bf16.xpose.msra.mxu0 %v108
    %115 = vmatpush.bf16.xpose.msra.mxu0 %v105
    %116 = vmatpush.bf16.xpose.msra.mxu0 %v102
    %117 = vmatpush.bf16.xpose.msra.mxu0 %v99
    %118 = vmatpush.bf16.xpose.msra.mxu0 %v96
    %119 = vmatpush.bf16.xpose.msra.mxu0 %v93
    %120 = vmatpush.bf16.xpose.msra.mxu0 %v90
    %121 = vmatmul.bf16.gmra.mxu0 %v87
    %v122 = vpop.f32.mrf.mxu0
    %v123 = vadd.f32 %v43, %v122
    %v124 = vpop.f32.mrf.mxu0
    %125 = vdwg.mxu0
    %v126 = vrot.slane %v123, 4
    %v127 = vadd.f32 %v123, %v126
    %v128 = vrot.slane %v127, 2
    %v129 = vadd.f32 %v127, %v128
    %v130 = vrot.slane %v129, 1
    %v131 = vadd.f32 %v129, %v130
    %v132 = vmul.f32 %v131, 0.125
    %v133 = vmul.f32 %v123, %v123
    %v134 = vrot.slane %v133, 4
    %v135 = vadd.f32 %v133, %v134
    %v136 = vrot.slane %v135, 2
    %v137 = vadd.f32 %v135, %v136
    %v138 = vrot.slane %v137, 1
    %v139 = vadd.f32 %v137, %v138
    %v140 = vmul.f32 %v139, 0.125
    %v141 = vmul.f32 %v132, %v132
    %v142 = vsub.f32 %v140, %v141
    %v143 = vmax.f32 %v142, 0.0
    %v144 = vsub.f32 %v123, %v132
    %v145 = vadd.f32 %v143, 1e-05
    %v146 = vrsqrt.pop %v145
    %v147 = vmul.f32 %v146, %v145
    %v148 = vmul.f32 %v147, %v146
    %v149 = vmul.f32 0.5, %v148
    %v150 = vsub.f32 1.5, %v149
    %v151 = vmul.f32 %v146, %v150
    %vm152 = vweird.f32 %v145
    %vm153 = vweird.f32 %v146
    %vm154 = vmor %vm152, %vm153
    %v155 = vsel %vm154, %v146, %v151
    %v156 = vmul.f32 %v144, %v155
    %v157 = vld [vmem:[%s4] sm:$0x1]
    %v159 = vperm.slane %v157, 0
    %v161 = vmul.f32 %v156, %v159
    %v162 = vld [vmem:[%s5] sm:$0x1]
    %v164 = vperm.slane %v162, 0
    %v166 = vadd.f32 %v161, %v164
    %v167 = vmax.f32 %v166, 0.0
    %v168 = vlaneseq
    %v169 = vshrl.u32 %v168, 7
    %v170 = vlaneseq
    %v171 = vand.u32 %v170, 127
    %s172 = smul.u32 0, 128
    %v173 = vstv %s172
    %v174 = vadd.s32 %v171, %v173
    %v175 = vmul.u32 %v169, 128
    %v176 = vadd.s32 %v175, %v174
    %s177 = sld [smem:[#allocation3]]
    %s178 = sadd.s32 %s177, 2654435769
    %s179 = sshrl.u32 %s178, 16
    %s180 = sxor.u32 %s178, %s179
    %s181 = smul.u32 %s180, 2246822507
    %s182 = sshrl.u32 %s181, 13
    %s183 = sxor.u32 %s181, %s182
    %s184 = smul.u32 %s183, 3266489909
    %s185 = sshrl.u32 %s184, 16
    %s186 = sxor.u32 %s184, %s185
    %v187 = vstv %s186
    %v188 = vxor.u32 %v176, %v187
    %v189 = vshrl.u32 %v188, 16
    %v190 = vxor.u32 %v188, %v189
    %v191 = vmul.u32 %v190, 2246822507
    %v192 = vshrl.u32 %v191, 13
    %v193 = vxor.u32 %v191, %v192
    %v194 = vmul.u32 %v193, 3266489909
    %v195 = vshrl.u32 %v194, 16
    %v196 = vxor.u32 %v194, %v195
    %v197 = vadd.s32 %v196, 2147483648
    %vm199 = vcmp.ge.s32.totalorder %v197, 3006477107
    %v200 = vmul.f32 %v167, 1.25
    %v201 = vsel %vm199, %v200, 0.0
    %202 = vst [vmem:[#allocation4] sm:$0xff] %v201
    // Predicated region
    $region22: #{tpu_custom_call.1} parent=1 // pred_check
      _
    $region23: #{tpu_custom_call.1} parent=1 // pred_check_branch
      %204 = sbr.rel (0) target = $region25
    $region24: #{tpu_custom_call.1} parent=1 // pred_region
      %206 = vsyncadd [#allocation5], 0
      %s208 = sshll.u32 [#allocation4], 4
      %s209 = int_to_ptr.vmem [resolvable:$true] %s208
      %s210 = sshll.u32 %s6, 4
      %s211 = int_to_ptr.hbm [resolvable:$true] %s210
      %213 = dma.vmem_to_hbm [thread:$0]  %s209, 128, %s211, [#allocation5]
    $region25: #{tpu_custom_call.1} parent=1 // pred_fallthru
      _
    // Predicated region
    $region26: #{tpu_custom_call.1} parent=1 // pred_check
      _
    $region27: #{tpu_custom_call.1} parent=1 // pred_check_branch
      %215 = sbr.rel (0) target = $region29
    $region28: #{tpu_custom_call.1} parent=1 // pred_region
      %217 = dma.done [#allocation5], 128
    $region29: #{tpu_custom_call.1} parent=1 // pred_fallthru
      _
    %218 = vsyncpa [#allocation5], 1

</llo_original>
